<compile_context>
chip_gen: v7x
topology: tpu7x:2x2x1
jax: 0.10.0
libtpu: 0.0.40
codegen_flags: <defaults>
</compile_context>

<pallas_src>
import jax
import jax.numpy as jnp
from jax import lax
from jax.experimental import pallas as pl
from jax.experimental.pallas import tpu as pltpu


def _linear_o1_kernel(b_ref, x_ref, w_ref, o_ref):
    # O == 1 fast path.
    # x_ref: (tb, F) VMEM tile, w_ref: (1, F) VMEM (resident across the grid),
    # b_ref: (1, 1) SMEM scalar, o_ref: (tb, 1).
    x = x_ref[...]
    w = w_ref[...]                                    # broadcasts over sublanes
    y = jnp.sum(x * w, axis=-1, keepdims=True) + b_ref[0, 0]
    # TODO(synk): output last dim == 1 means masked partial stores; if this is
    # ever fused with more output heads, batch them so the last dim reaches 128.
    o_ref[...] = y.astype(o_ref.dtype)


def _linear_kernel(x_ref, w_ref, b_ref, o_ref):
    # General path: contract over F with the weight in its native (O, F) layout.
    x = x_ref[...]              # (tb, F)
    w = w_ref[...]              # (O, F)
    y = lax.dot_general(x, w, (((1,), (1,)), ((), ())),
                        preferred_element_type=jnp.float32)
    o_ref[...] = (y + b_ref[...]).astype(o_ref.dtype)


def _pick_batch_tile(B):
    # Second-to-last block dim must be a multiple of 8 or equal the full dim.
    for tb in (1024, 512, 256, 128, 64, 32, 16, 8):
        if B % tb == 0:
            return tb
    return B


def linear_forward(x, weight, bias):
    """x: (B, F); weight: (O, F) as stored by torch.nn.Linear; bias: (O,)."""
    B, F = x.shape
    O = weight.shape[0]
    tb = _pick_batch_tile(B)
    grid = (B // tb,)
    cparams = pltpu.CompilerParams(dimension_semantics=("parallel",))

    if O == 1:
        b_smem = bias.reshape(1, 1).astype(jnp.float32)
        return pl.pallas_call(
            _linear_o1_kernel,
            out_shape=jax.ShapeDtypeStruct((B, O), jnp.float32),
            grid=grid,
            in_specs=[
                pl.BlockSpec(memory_space=pltpu.MemorySpace.SMEM),  # bias scalar
                pl.BlockSpec((tb, F), lambda i: (i, 0)),            # x row tile
                pl.BlockSpec((1, F), lambda i: (0, 0)),             # weight (resident)
            ],
            out_specs=pl.BlockSpec((tb, O), lambda i: (i, 0)),
            compiler_params=cparams,
        )(b_smem, x, weight)

    # General O > 1 path (not hit by this module, kept for completeness).
    b2 = bias.reshape(1, O).astype(jnp.float32)
    return pl.pallas_call(
        _linear_kernel,
        out_shape=jax.ShapeDtypeStruct((B, O), jnp.float32),
        grid=grid,
        in_specs=[
            pl.BlockSpec((tb, F), lambda i: (i, 0)),
            pl.BlockSpec((O, F), lambda i: (0, 0)),
            pl.BlockSpec((1, O), lambda i: (0, 0)),
        ],
        out_specs=pl.BlockSpec((tb, O), lambda i: (i, 0)),
        compiler_params=cparams,
    )(x, weight, b2)


if __name__ == "__main__":
    # Admission_Predict.csv-style features: 7 input features, 1 target column.
    batch, in_features, out_features = 8, 7, 1

    key = jax.random.PRNGKey(0)
    kx, kw, kb = jax.random.split(key, 3)

    x = jax.random.normal(kx, (batch, in_features), dtype=jnp.float32)
    # Deterministic param init (mimics nn.Linear uniform(-1/sqrt(F), 1/sqrt(F))).
    bound = 1.0 / (in_features ** 0.5)
    weight = jax.random.uniform(
        kw, (out_features, in_features), minval=-bound, maxval=bound,
        dtype=jnp.float32)
    bias = jax.random.uniform(
        kb, (out_features,), minval=-bound, maxval=bound, dtype=jnp.float32)

    y = linear_forward(x, weight, bias)
    jax.block_until_ready(y)

    # Cross-check against plain JAX reference.
    y_ref = x @ weight.T + bias
    assert y.shape == (batch, out_features)
    assert jnp.allclose(y, y_ref, atol=1e-5), "mismatch vs reference"

    print("KERNEL_OK")
</pallas_src>

<mosaic_0001>
module attributes {stable_mosaic.version = 11 : i64} {
  func.func @_linear_o1_kernel(%arg0: i32, %arg1: memref<1x1xf32, #tpu.memory_space<smem>>, %arg2: memref<8x7xf32, #tpu.memory_space<vmem>>, %arg3: memref<1x7xf32, #tpu.memory_space<vmem>>, %arg4: memref<8x1xf32, #tpu.memory_space<vmem>>) attributes {dimension_semantics = [#tpu.dimension_semantics<parallel>], iteration_bounds = array<i64: 1>, scalar_prefetch = 0 : i64, scratch_operands = 0 : i64, tpu.core_type = #tpu.core_type<tc>, window_params = [{transform_indices = @transform_0, window_bounds = array<i64: 1, 1>}, {transform_indices = @transform_1, window_bounds = array<i64: 8, 7>}, {pipeline_mode = #tpu.pipeline_mode<synchronous>, transform_indices = @transform_2, window_bounds = array<i64: 1, 7>}, {transform_indices = @transform_3, window_bounds = array<i64: 8, 1>}]} {
    %c0 = arith.constant 0 : index
    %c0_0 = arith.constant 0 : index
    %0 = vector.load %arg2[%c0, %c0_0] : memref<8x7xf32, #tpu.memory_space<vmem>>, vector<8x7xf32>
    %c0_1 = arith.constant 0 : index
    %c0_2 = arith.constant 0 : index
    %1 = vector.load %arg3[%c0_1, %c0_2] : memref<1x7xf32, #tpu.memory_space<vmem>>, vector<1x7xf32>
    %2 = vector.broadcast %1 : vector<1x7xf32> to vector<8x7xf32>
    %3 = arith.mulf %0, %2 : vector<8x7xf32>
    %cst = arith.constant dense<0.000000e+00> : vector<8xf32>
    %4 = vector.multi_reduction <add>, %3, %cst [1] : vector<8x7xf32> to vector<8xf32>
    %5 = vector.shape_cast %4 : vector<8xf32> to vector<8x1xf32>
    %c0_3 = arith.constant 0 : index
    %c0_4 = arith.constant 0 : index
    %6 = memref.load %arg1[%c0_3, %c0_4] : memref<1x1xf32, #tpu.memory_space<smem>>
    %7 = vector.broadcast %6 : f32 to vector<8x1xf32>
    %8 = arith.addf %5, %7 : vector<8x1xf32>
    %c0_5 = arith.constant 0 : index
    %c0_6 = arith.constant 0 : index
    %9 = vector.load %arg4[%c0_5, %c0_6] : memref<8x1xf32, #tpu.memory_space<vmem>>, vector<8x1xf32>
    tpu.vector_store %arg4[%c0_5, %c0_6], %8 {strides = array<i32>} : memref<8x1xf32, #tpu.memory_space<vmem>>, vector<8x1xf32>,
    return
  }
  func.func @transform_0(%arg0: i32) -> (i32, i32) {
    %c0_i32 = arith.constant 0 : i32
    %c0_i32_0 = arith.constant 0 : i32
    %c0_i32_1 = arith.constant 0 : i32
    return %c0_i32, %c0_i32_0 : i32, i32
  }
  func.func @transform_1(%arg0: i32) -> (i32, i32) {
    %c0_i32 = arith.constant 0 : i32
    %c0_i32_0 = arith.constant 0 : i32
    return %arg0, %c0_i32 : i32, i32
  }
  func.func @transform_2(%arg0: i32) -> (i32, i32) {
    %c0_i32 = arith.constant 0 : i32
    %c0_i32_0 = arith.constant 0 : i32
    %c0_i32_1 = arith.constant 0 : i32
    return %c0_i32, %c0_i32_0 : i32, i32
  }
  func.func @transform_3(%arg0: i32) -> (i32, i32) {
    %c0_i32 = arith.constant 0 : i32
    %c0_i32_0 = arith.constant 0 : i32
    return %arg0, %c0_i32 : i32, i32
  }
}

</mosaic_0001>

<llo_original>
// kernel: tpu_custom_call.1
$region0: #{tpu_custom_call.1}
  #allocation0 [shape = 'u32[]', space=smem, size = 0x4, offset = 0x4, fixed_abs, tag = 'smem constant byte address 0x4 - core index']
  #allocation1 [shape = 'u32[144,128]{1,0:T(1,128)}', space=vmem, size = 0x12000, scoped, tag = 'internal scratch']
  #allocation2 [shape = 'f32[1,1]{1,0:T(1,128)S(6)}', space=smem, size = 0x200, scoped, tag = 'scoped memory for tpu_custom_call.1']
  %s0 = inlined_call_operand.<no memory space> [shape: f32[1,1], index: 0, kind: input, shape index: {}]
  %s1 = inlined_call_operand.hbm [shape: f32[8,7], index: 1, kind: input, shape index: {}]
  %s2 = inlined_call_operand.vmem [shape: f32[1,7], index: 2, kind: input, shape index: {}]
  %s3 = inlined_call_operand.vmem [shape: f32[8,1], index: 3, kind: output, shape index: {}]
  %s4 = sld [smem:[#allocation0]]
  $region26: #{tpu_custom_call.1} parent=0
    _
  %s6 = ssub.s32 1, %s4
  %s7 = scalar_select 0, %s6, %s4
  %8 = sst [smem:[#allocation2]] %s0
  $region1: #{tpu_custom_call.1} parent=0
    #allocation3 [shape = 'u8[4096]{0}', space=vmem, size = 0x1000, scoped, tag = 'input window, operand 1, single buffered']
    #allocation4 [shape = 's32[1]{0}', space=sflag, size = 0x4, scoped, tag = 'scoped memory for tpu_custom_call.1']
    %9 = vsyncpa [#allocation4], 0
    // Predicated region
    $region2: #{tpu_custom_call.1} parent=1 // pred_check
      _
    $region3: #{tpu_custom_call.1} parent=1 // pred_check_branch
      %11 = sbr.rel (0) target = $region5
    $region4: #{tpu_custom_call.1} parent=1 // pred_region
      _
    $region5: #{tpu_custom_call.1} parent=1 // pred_fallthru
      _
    // Predicated region
    $region6: #{tpu_custom_call.1} parent=1 // pred_check
      _
    $region7: #{tpu_custom_call.1} parent=1 // pred_check_branch
      %13 = sbr.rel (0) target = $region9
    $region8: #{tpu_custom_call.1} parent=1 // pred_region
      %s15 = ssub.s32 128, 128
      %16 = vsyncadd [#allocation4], %s15
      %s18 = sshll.u32 [#allocation3], 4
      %s19 = int_to_ptr.vmem [resolvable:$true] %s18
      %21 = dma.hbm_to_vmem [thread:$0]  %s1, 128, %s19, [#allocation4]
    $region9: #{tpu_custom_call.1} parent=1 // pred_fallthru
      _
    // Predicated region
    $region10: #{tpu_custom_call.1} parent=1 // pred_check
      _
    $region11: #{tpu_custom_call.1} parent=1 // pred_check_branch
      %23 = sbr.rel (0) target = $region13
    $region12: #{tpu_custom_call.1} parent=1 // pred_region
      _
    $region13: #{tpu_custom_call.1} parent=1 // pred_fallthru
      _
    // Predicated region
    $region14: #{tpu_custom_call.1} parent=1 // pred_check
      _
    $region15: #{tpu_custom_call.1} parent=1 // pred_check_branch
      %25 = sbr.rel (0) target = $region17
    $region16: #{tpu_custom_call.1} parent=1 // pred_region
      %26 = dma.done [#allocation4], 128
    $region17: #{tpu_custom_call.1} parent=1 // pred_fallthru
      _
    %v27 = vld [vmem:[#allocation3] sm:$0xff]
    %v28 = vld [vmem:[%s2] sm:$0x1]
    %v30 = vlaneseq
    %v31 = vshrl.u32 %v30, 7
    %v32 = vsub.s32 0, %v31
    %v33 = vrot.slane %v28, %v32
    %v35 = vmul.f32 %v27, %v33
    %vm36 = vcmask 56320
    %v37 = vsel %vm36, %v35, 0.0
    %38 = vadd.xlane.f32.xlu0 %v37
    %v39 = vpop.xlane.xlu0 %38
    %s40 = sld [smem:[#allocation2]]
    %v41 = vstv %s40
    %v42 = vadd.f32 %v39, %v41
    %vm43 = vcmask 7168
    %44 = vst.msk [vmem:[%s3] sm:$0xff] %vm43, %v42
    // Predicated region
    $region18: #{tpu_custom_call.1} parent=1 // pred_check
      _
    $region19: #{tpu_custom_call.1} parent=1 // pred_check_branch
      %46 = sbr.rel (0) target = $region21
    $region20: #{tpu_custom_call.1} parent=1 // pred_region
      _
    $region21: #{tpu_custom_call.1} parent=1 // pred_fallthru
      _
    // Predicated region
    $region22: #{tpu_custom_call.1} parent=1 // pred_check
      _
    $region23: #{tpu_custom_call.1} parent=1 // pred_check_branch
      %48 = sbr.rel (0) target = $region25
    $region24: #{tpu_custom_call.1} parent=1 // pred_region
      _
    $region25: #{tpu_custom_call.1} parent=1 // pred_fallthru
      _
    %49 = vsyncpa [#allocation4], 1

</llo_original>
